<compile_context>
chip_gen: v7x
topology: tpu7x:2x2x1
jax: 0.10.0
libtpu: 0.0.40
codegen_flags: <defaults>
</compile_context>

<pallas_src>
import functools

import jax
import jax.numpy as jnp
from jax import lax
from jax.experimental import pallas as pl
from jax.experimental.pallas import tpu as pltpu


# --------------------------------------------------------------------------- helpers
def _round_up(a, b):
    return (a + b - 1) // b * b


def _vmem_config():
    """Return (vmem_limit_bytes, per-tile byte budget), generation aware.

    v5e/v6e: 128 MiB physical VMEM -> 64 MiB scoped limit, 8 MiB tiles.
    v7x:      64 MiB physical VMEM -> 32 MiB scoped limit, 4 MiB tiles.
    Unknown: conservative v7x numbers.
    """
    cap = 0
    try:
        cap = int(getattr(pltpu.get_tpu_info(), "vmem_capacity_bytes", 0) or 0)
    except Exception:
        cap = 0
    if cap >= 128 * 1024 * 1024:
        return 64 * 1024 * 1024, 8 * 1024 * 1024
    return 32 * 1024 * 1024, 4 * 1024 * 1024


def _row_align(itemsize):
    # sublane packing: f32 -> 8, bf16 -> 16, int8 -> 32
    return max(8, 32 // max(itemsize, 1))


def _pick_tiles(rows, hw, itemsize, tile_budget_bytes):
    """Pick (TR, THW): TR multiple of sublane packing, THW multiple of 128,
    TR*THW*itemsize <= tile_budget_bytes.  Ragged edges handled by cdiv grid
    (+ lane masking in pass 1)."""
    lane = 128
    ra = _row_align(itemsize)
    hw_p = _round_up(hw, lane)
    rows_p = _round_up(rows, ra)
    budget_elems = max(tile_budget_bytes // max(itemsize, 1), ra * lane)
    # Prefer long lane tiles (fewer reduction steps), then grow rows.
    thw = min(hw_p, (budget_elems // ra) // lane * lane)
    thw = max(thw, lane)
    tr = min(rows_p, (budget_elems // thw) // ra * ra)
    tr = max(tr, ra)
    return tr, thw


# --------------------------------------------------------------------------- kernels
def _stats_kernel(x_ref, sum_ref, sq_ref, *, hw, thw, ragged):
    """Grid (row-blocks, hw-tiles).  Per-row sum / sumsq accumulated into a
    VMEM-resident (TR, 1) output block revisited along the hw-tile axis.
    Rows stay on sublanes -> no sublane->lane relayout of the reduced result."""
    @pl.when(pl.program_id(1) == 0)
    def _():
        sum_ref[...] = jnp.zeros_like(sum_ref)
        sq_ref[...] = jnp.zeros_like(sq_ref)

    x = x_ref[...].astype(jnp.float32)                      # (TR, THW)
    if ragged:
        # Partial last hw-tile reads unspecified data past the array: mask it.
        rem = jnp.int32(hw) - pl.program_id(1) * thw
        col = lax.broadcasted_iota(jnp.int32, x.shape, 1)
        x = jnp.where(col < rem, x, 0.0)
    sum_ref[...] += jnp.sum(x, axis=-1, keepdims=True)      # (TR, 1)
    sq_ref[...] += jnp.sum(x * x, axis=-1, keepdims=True)   # (TR, 1)


def _apply_kernel(x_ref, scale_ref, shift_ref, o_ref):
    """Streamed normalization folded into a per-row scale/shift FMA."""
    x = x_ref[...].astype(jnp.float32)                      # (TR, THW)
    o_ref[...] = (x * scale_ref[...] + shift_ref[...]).astype(o_ref.dtype)


def _fused_kernel(x_ref, rm_ref, rv_ref, w_ref, b_ref, mw_ref, vw_ref,
                  o_ref, mbn_ref, vbn_ref, *, hw, eps, training):
    """Single-read fused path: whole (N, C, HW) tensor resident in VMEM."""
    x = x_ref[...].astype(jnp.float32)                      # (N, C, HW)
    hw_f = jnp.float32(hw)

    mean_in = jnp.sum(x, axis=-1, keepdims=True) / hw_f     # (N, C, 1)
    xm = x - mean_in                                         # centered var (x is resident)
    var_in = jnp.sum(xm * xm, axis=-1, keepdims=True) / jnp.float32(hw - 1)
    temp = var_in + mean_in * mean_in

    mean_ln = jnp.mean(mean_in, axis=1, keepdims=True)                       # (N, 1, 1)
    var_ln = jnp.mean(temp, axis=1, keepdims=True) - mean_ln * mean_ln       # (N, 1, 1)

    if training:
        mean_bn = jnp.mean(mean_in, axis=0, keepdims=True)                   # (1, C, 1)
        var_bn = jnp.mean(temp, axis=0, keepdims=True) - mean_bn * mean_bn   # (1, C, 1)
    else:
        mean_bn = rm_ref[...].astype(jnp.float32)                            # (1, C, 1)
        var_bn = rv_ref[...].astype(jnp.float32)
    mbn_ref[...] = mean_bn
    vbn_ref[...] = var_bn

    mw0, mw1, mw2 = mw_ref[0], mw_ref[1], mw_ref[2]          # SMEM scalars (softmaxed)
    vw0, vw1, vw2 = vw_ref[0], vw_ref[1], vw_ref[2]
    mean = mw0 * mean_in + mw1 * mean_ln + mw2 * mean_bn     # (N, C, 1)
    var = vw0 * var_in + vw1 * var_ln + vw2 * var_bn         # (N, C, 1)

    inv = lax.rsqrt(var + jnp.float32(eps))
    scale = w_ref[...].astype(jnp.float32) * inv             # (1,C,1)*(N,C,1) -> (N,C,1)
    shift = b_ref[...].astype(jnp.float32) - mean * scale
    o_ref[...] = (x * scale + shift).astype(o_ref.dtype)


# --------------------------------------------------------------------------- wrapper
def switch_norm(x, running_mean, running_var, weight, bias, mean_weight, var_weight,
                training=True, momentum=0.9, eps=1e-5, use_fused=None):
    """x: NCHW. Returns (y_nchw, new_running_mean, new_running_var)."""
    N, C, H, W = x.shape
    HW = H * W
    R = N * C
    itemsize = jnp.dtype(x.dtype).itemsize
    vmem_limit, tile_budget = _vmem_config()

    rm = running_mean.astype(jnp.float32)
    rv = running_var.astype(jnp.float32)
    mw = jax.nn.softmax(mean_weight.astype(jnp.float32))
    vw = jax.nn.softmax(var_weight.astype(jnp.float32))

    if use_fused is None:
        ra = _row_align(itemsize)
        padded_native = N * _round_up(C, ra) * _round_up(HW, 128) * itemsize
        padded_f32 = N * _round_up(C, 8) * _round_up(HW, 128) * 4
        use_fused = (2 * padded_native + 4 * padded_f32) <= int(0.8 * vmem_limit)

    # ---------------- Fused single-read path (x fits comfortably in VMEM). ----------------
    if use_fused:
        xv = x.reshape(N, C, HW)
        kern = functools.partial(_fused_kernel, hw=HW, eps=float(eps),
                                 training=bool(training))
        y3, mbn, vbn = pl.pallas_call(
            kern,
            out_shape=(jax.ShapeDtypeStruct((N, C, HW), x.dtype),
                       jax.ShapeDtypeStruct((1, C, 1), jnp.float32),
                       jax.ShapeDtypeStruct((1, C, 1), jnp.float32)),
            in_specs=[pl.BlockSpec(memory_space=pltpu.MemorySpace.VMEM)] * 5
                     + [pl.BlockSpec(memory_space=pltpu.MemorySpace.SMEM)] * 2,
            out_specs=(pl.BlockSpec(memory_space=pltpu.MemorySpace.VMEM),
                       pl.BlockSpec(memory_space=pltpu.MemorySpace.VMEM),
                       pl.BlockSpec(memory_space=pltpu.MemorySpace.VMEM)),
            compiler_params=pltpu.CompilerParams(vmem_limit_bytes=vmem_limit),
            cost_estimate=pl.CostEstimate(
                flops=int(10 * R * HW), transcendentals=int(R),
                bytes_accessed=int(2 * R * HW * itemsize + 8 * R + 16 * C)),
        )(xv, rm.reshape(1, C, 1), rv.reshape(1, C, 1),
          weight.astype(jnp.float32).reshape(1, C, 1),
          bias.astype(jnp.float32).reshape(1, C, 1),
          mw, vw)

        if training:
            new_rm = momentum * rm + (1.0 - momentum) * mbn.reshape(C)
            new_rv = momentum * rv + (1.0 - momentum) * vbn.reshape(C)
        else:
            new_rm, new_rv = rm, rv
        return (y3.reshape(N, C, H, W),
                new_rm.astype(running_mean.dtype),
                new_rv.astype(running_var.dtype))

    # ---------------- Two-pass streaming path. ----------------
    xv = x.reshape(R, HW)                          # metadata-only reshape
    TR, THW = _pick_tiles(R, HW, itemsize, tile_budget)
    n_rb = pl.cdiv(R, TR)
    n_t = pl.cdiv(HW, THW)
    ragged = (HW % THW) != 0

    # Pass 1: per-row sum / sumsq.
    sums, sqs = pl.pallas_call(
        functools.partial(_stats_kernel, hw=HW, thw=THW, ragged=ragged),
        out_shape=(jax.ShapeDtypeStruct((R, 1), jnp.float32),
                   jax.ShapeDtypeStruct((R, 1), jnp.float32)),
        grid_spec=pltpu.PrefetchScalarGridSpec(
            num_scalar_prefetch=0,
            grid=(n_rb, n_t),
            in_specs=[pl.BlockSpec((TR, THW), lambda r, t: (r, t))],
            out_specs=(pl.BlockSpec((TR, 1), lambda r, t: (r, 0)),
                       pl.BlockSpec((TR, 1), lambda r, t: (r, 0)))),
        compiler_params=pltpu.CompilerParams(
            dimension_semantics=("parallel", "arbitrary"),
            vmem_limit_bytes=vmem_limit),
        cost_estimate=pl.CostEstimate(
            flops=int(3 * R * HW), transcendentals=0,
            bytes_accessed=int(R * HW * itemsize + 8 * R)),
    )(xv)

    # Tiny (N, C) mixing math in plain JAX.
    sums = sums.reshape(N, C)
    sqs = sqs.reshape(N, C)
    hw_f = jnp.float32(HW)
    mean_in = sums / hw_f                                                    # (N, C)
    var_in = (sqs - hw_f * mean_in * mean_in) / jnp.float32(HW - 1)          # unbiased
    temp = var_in + mean_in * mean_in

    mean_ln = jnp.mean(mean_in, axis=1, keepdims=True)                       # (N, 1)
    var_ln = jnp.mean(temp, axis=1, keepdims=True) - mean_ln * mean_ln

    if training:
        mean_bn = jnp.mean(mean_in, axis=0, keepdims=True)                   # (1, C)
        var_bn = jnp.mean(temp, axis=0, keepdims=True) - mean_bn * mean_bn
        new_rm = momentum * rm + (1.0 - momentum) * mean_bn.reshape(-1)
        new_rv = momentum * rv + (1.0 - momentum) * var_bn.reshape(-1)
    else:
        mean_bn = rm.reshape(1, C)
        var_bn = rv.reshape(1, C)
        new_rm, new_rv = rm, rv

    mean = mw[0] * mean_in + mw[1] * mean_ln + mw[2] * mean_bn               # (N, C)
    var = vw[0] * var_in + vw[1] * var_ln + vw[2] * var_bn

    # Fold normalize + affine into per-row scale/shift (rsqrt only on N*C elems).
    inv = lax.rsqrt(var + jnp.float32(eps))
    scale = weight.astype(jnp.float32).reshape(1, C) * inv                   # (N, C)
    shift = bias.astype(jnp.float32).reshape(1, C) - mean * scale
    scale_r = scale.reshape(R, 1)
    shift_r = shift.reshape(R, 1)

    # Pass 2: streamed y = x*scale + shift.
    out = pl.pallas_call(
        _apply_kernel,
        out_shape=jax.ShapeDtypeStruct((R, HW), x.dtype),
        grid_spec=pltpu.PrefetchScalarGridSpec(
            num_scalar_prefetch=0,
            grid=(n_rb, n_t),
            in_specs=[pl.BlockSpec((TR, THW), lambda r, t: (r, t)),
                      pl.BlockSpec((TR, 1), lambda r, t: (r, 0)),
                      pl.BlockSpec((TR, 1), lambda r, t: (r, 0))],
            out_specs=pl.BlockSpec((TR, THW), lambda r, t: (r, t))),
        compiler_params=pltpu.CompilerParams(
            dimension_semantics=("parallel", "parallel"),
            vmem_limit_bytes=vmem_limit),
        cost_estimate=pl.CostEstimate(
            flops=int(2 * R * HW), transcendentals=0,
            bytes_accessed=int(2 * R * HW * itemsize + 8 * R)),
    )(xv, scale_r, shift_r)

    return (out.reshape(N, C, H, W),
            new_rm.astype(running_mean.dtype),
            new_rv.astype(running_var.dtype))


# --------------------------------------------------------------------------- reference
def switch_norm_ref(x, running_mean, running_var, weight, bias, mean_weight, var_weight,
                    training=True, momentum=0.9, eps=1e-5):
    """Pure-JAX reference mirroring torch_toolbox F.switch_norm."""
    N, C, H, W = x.shape
    xv = x.reshape(N, C, -1).astype(jnp.float32)
    mean_in = xv.mean(-1, keepdims=True)
    var_in = xv.var(-1, ddof=1, keepdims=True)
    mean_ln = mean_in.mean(1, keepdims=True)
    temp = var_in + mean_in ** 2
    var_ln = temp.mean(1, keepdims=True) - mean_ln ** 2
    if training:
        mean_bn = mean_in.mean(0, keepdims=True)
        var_bn = temp.mean(0, keepdims=True) - mean_bn ** 2
        new_rm = momentum * running_mean + (1.0 - momentum) * mean_bn.reshape(-1)
        new_rv = momentum * running_var + (1.0 - momentum) * var_bn.reshape(-1)
    else:
        mean_bn = running_mean.reshape(1, C, 1)
        var_bn = running_var.reshape(1, C, 1)
        new_rm, new_rv = running_mean, running_var
    mw = jax.nn.softmax(mean_weight)
    vw = jax.nn.softmax(var_weight)
    mean = mw[0] * mean_in + mw[1] * mean_ln + mw[2] * mean_bn
    var = vw[0] * var_in + vw[1] * var_ln + vw[2] * var_bn
    xn = (xv - mean) / jnp.sqrt(var + eps)
    xn = xn.reshape(N, C, H, W)
    y = xn * weight.reshape(1, C, 1, 1) + bias.reshape(1, C, 1, 1)
    return y, new_rm, new_rv


# --------------------------------------------------------------------------- test
if __name__ == "__main__":
    root = jax.random.PRNGKey(0)
    cases = [
        (2, 4, 16, 16),   # nominal small shape (HW lane-aligned, rows = sublane-aligned)
        (3, 5, 10, 10),   # ragged rows (N*C=15) and ragged HW (100): exercises masking
    ]
    case_keys = jax.random.split(root, len(cases))

    for case_key, (N, C, H, W) in zip(case_keys, cases):
        kx, kw, kb = jax.random.split(case_key, 3)
        x = jax.random.normal(kx, (N, C, H, W), dtype=jnp.float32)

        # Parameters as in _SwitchNorm.__init__ (weight/bias uninitialized in torch ->
        # deterministic random init here; mixing logits = ones; running stats = 0/1).
        weight = jax.random.normal(kw, (C,), dtype=jnp.float32)
        bias = jax.random.normal(kb, (C,), dtype=jnp.float32)
        mean_weight = jnp.ones((3,), dtype=jnp.float32)
        var_weight = jnp.ones((3,), dtype=jnp.float32)
        running_mean = jnp.zeros((C,), dtype=jnp.float32)
        running_var = jnp.ones((C,), dtype=jnp.float32)

        for training in (True, False):
            y_exp, rm_exp, rv_exp = switch_norm_ref(
                x, running_mean, running_var, weight, bias, mean_weight, var_weight,
                training=training, momentum=0.9, eps=1e-5)
            for fused in (True, False):   # exercise both the fused and two-pass paths
                y, rm_new, rv_new = switch_norm(
                    x, running_mean, running_var, weight, bias, mean_weight, var_weight,
                    training=training, momentum=0.9, eps=1e-5, use_fused=fused)
                jax.block_until_ready((y, rm_new, rv_new))
                tag = f"N{N}C{C}H{H}W{W} train={training} fused={fused}"
                assert jnp.allclose(y, y_exp, rtol=1e-4, atol=1e-4), f"output mismatch: {tag}"
                assert jnp.allclose(rm_new, rm_exp, rtol=1e-5, atol=1e-6), \
                    f"running_mean mismatch: {tag}"
                assert jnp.allclose(rv_new, rv_exp, rtol=1e-5, atol=1e-6), \
                    f"running_var mismatch: {tag}"

    print("KERNEL_OK")
</pallas_src>

<mosaic_0001>
module attributes {stable_mosaic.version = 11 : i64} {
  func.func @_fused_kernel(%arg0: memref<2x4x256xf32, #tpu.memory_space<vmem>>, %arg1: memref<1x4x1xf32, #tpu.memory_space<vmem>>, %arg2: memref<1x4x1xf32, #tpu.memory_space<vmem>>, %arg3: memref<1x4x1xf32, #tpu.memory_space<vmem>>, %arg4: memref<1x4x1xf32, #tpu.memory_space<vmem>>, %arg5: memref<3xf32, #tpu.memory_space<smem>>, %arg6: memref<3xf32, #tpu.memory_space<smem>>, %arg7: memref<2x4x256xf32, #tpu.memory_space<vmem>>, %arg8: memref<1x4x1xf32, #tpu.memory_space<vmem>>, %arg9: memref<1x4x1xf32, #tpu.memory_space<vmem>>) attributes {dimension_semantics = [], scalar_prefetch = 0 : i64, scratch_operands = 0 : i64, tpu.core_type = #tpu.core_type<tc>} {
    %c0 = arith.constant 0 : index
    %c0_0 = arith.constant 0 : index
    %c0_1 = arith.constant 0 : index
    %0 = vector.load %arg0[%c0, %c0_0, %c0_1] : memref<2x4x256xf32, #tpu.memory_space<vmem>>, vector<2x4x256xf32>
    %cst = arith.constant dense<0.000000e+00> : vector<2x4xf32>
    %1 = vector.multi_reduction <add>, %0, %cst [2] : vector<2x4x256xf32> to vector<2x4xf32>
    %2 = vector.shape_cast %1 : vector<2x4xf32> to vector<2x4x1xf32>
    %cst_2 = arith.constant 2.560000e+02 : f32
    %3 = vector.broadcast %cst_2 : f32 to vector<2x4x1xf32>
    %4 = arith.divf %2, %3 : vector<2x4x1xf32>
    %5 = vector.broadcast %4 : vector<2x4x1xf32> to vector<2x4x256xf32>
    %6 = arith.subf %0, %5 : vector<2x4x256xf32>
    %7 = arith.mulf %6, %6 : vector<2x4x256xf32>
    %cst_3 = arith.constant dense<0.000000e+00> : vector<2x4xf32>
    %8 = vector.multi_reduction <add>, %7, %cst_3 [2] : vector<2x4x256xf32> to vector<2x4xf32>
    %9 = vector.shape_cast %8 : vector<2x4xf32> to vector<2x4x1xf32>
    %cst_4 = arith.constant 2.550000e+02 : f32
    %10 = vector.broadcast %cst_4 : f32 to vector<2x4x1xf32>
    %11 = arith.divf %9, %10 : vector<2x4x1xf32>
    %12 = arith.mulf %4, %4 : vector<2x4x1xf32>
    %13 = arith.addf %11, %12 : vector<2x4x1xf32>
    %cst_5 = arith.constant dense<0.000000e+00> : vector<2x1xf32>
    %14 = vector.multi_reduction <add>, %4, %cst_5 [1] : vector<2x4x1xf32> to vector<2x1xf32>
    %15 = vector.shape_cast %14 : vector<2x1xf32> to vector<2x1x1xf32>
    %cst_6 = arith.constant 4.000000e+00 : f32
    %16 = vector.broadcast %cst_6 : f32 to vector<2x1x1xf32>
    %17 = arith.divf %15, %16 : vector<2x1x1xf32>
    %cst_7 = arith.constant dense<0.000000e+00> : vector<2x1xf32>
    %18 = vector.multi_reduction <add>, %13, %cst_7 [1] : vector<2x4x1xf32> to vector<2x1xf32>
    %19 = vector.shape_cast %18 : vector<2x1xf32> to vector<2x1x1xf32>
    %cst_8 = arith.constant 4.000000e+00 : f32
    %20 = vector.broadcast %cst_8 : f32 to vector<2x1x1xf32>
    %21 = arith.divf %19, %20 : vector<2x1x1xf32>
    %22 = arith.mulf %17, %17 : vector<2x1x1xf32>
    %23 = arith.subf %21, %22 : vector<2x1x1xf32>
    %cst_9 = arith.constant dense<0.000000e+00> : vector<4x1xf32>
    %24 = vector.multi_reduction <add>, %4, %cst_9 [0] : vector<2x4x1xf32> to vector<4x1xf32>
    %25 = vector.shape_cast %24 : vector<4x1xf32> to vector<1x4x1xf32>
    %cst_10 = arith.constant 2.000000e+00 : f32
    %26 = vector.broadcast %cst_10 : f32 to vector<1x4x1xf32>
    %27 = arith.divf %25, %26 : vector<1x4x1xf32>
    %cst_11 = arith.constant dense<0.000000e+00> : vector<4x1xf32>
    %28 = vector.multi_reduction <add>, %13, %cst_11 [0] : vector<2x4x1xf32> to vector<4x1xf32>
    %29 = vector.shape_cast %28 : vector<4x1xf32> to vector<1x4x1xf32>
    %cst_12 = arith.constant 2.000000e+00 : f32
    %30 = vector.broadcast %cst_12 : f32 to vector<1x4x1xf32>
    %31 = arith.divf %29, %30 : vector<1x4x1xf32>
    %32 = arith.mulf %27, %27 : vector<1x4x1xf32>
    %33 = arith.subf %31, %32 : vector<1x4x1xf32>
    %c0_13 = arith.constant 0 : index
    %c0_14 = arith.constant 0 : index
    %c0_15 = arith.constant 0 : index
    %34 = vector.load %arg8[%c0_13, %c0_14, %c0_15] : memref<1x4x1xf32, #tpu.memory_space<vmem>>, vector<1x4x1xf32>
    tpu.vector_store %arg8[%c0_13, %c0_14, %c0_15], %27 {strides = array<i32>} : memref<1x4x1xf32, #tpu.memory_space<vmem>>, vector<1x4x1xf32>,
    %c0_16 = arith.constant 0 : index
    %c0_17 = arith.constant 0 : index
    %c0_18 = arith.constant 0 : index
    %35 = vector.load %arg9[%c0_16, %c0_17, %c0_18] : memref<1x4x1xf32, #tpu.memory_space<vmem>>, vector<1x4x1xf32>
    tpu.vector_store %arg9[%c0_16, %c0_17, %c0_18], %33 {strides = array<i32>} : memref<1x4x1xf32, #tpu.memory_space<vmem>>, vector<1x4x1xf32>,
    %c0_19 = arith.constant 0 : index
    %36 = memref.load %arg5[%c0_19] : memref<3xf32, #tpu.memory_space<smem>>
    %c1 = arith.constant 1 : index
    %37 = memref.load %arg5[%c1] : memref<3xf32, #tpu.memory_space<smem>>
    %c2 = arith.constant 2 : index
    %38 = memref.load %arg5[%c2] : memref<3xf32, #tpu.memory_space<smem>>
    %c0_20 = arith.constant 0 : index
    %39 = memref.load %arg6[%c0_20] : memref<3xf32, #tpu.memory_space<smem>>
    %c1_21 = arith.constant 1 : index
    %40 = memref.load %arg6[%c1_21] : memref<3xf32, #tpu.memory_space<smem>>
    %c2_22 = arith.constant 2 : index
    %41 = memref.load %arg6[%c2_22] : memref<3xf32, #tpu.memory_space<smem>>
    %42 = vector.broadcast %36 : f32 to vector<2x4x1xf32>
    %43 = arith.mulf %42, %4 : vector<2x4x1xf32>
    %44 = vector.broadcast %37 : f32 to vector<2x1x1xf32>
    %45 = arith.mulf %44, %17 : vector<2x1x1xf32>
    %46 = vector.broadcast %45 : vector<2x1x1xf32> to vector<2x4x1xf32>
    %47 = arith.addf %43, %46 : vector<2x4x1xf32>
    %48 = vector.broadcast %38 : f32 to vector<1x4x1xf32>
    %49 = arith.mulf %48, %27 : vector<1x4x1xf32>
    %50 = vector.broadcast %49 : vector<1x4x1xf32> to vector<2x4x1xf32>
    %51 = arith.addf %47, %50 : vector<2x4x1xf32>
    %52 = vector.broadcast %39 : f32 to vector<2x4x1xf32>
    %53 = arith.mulf %52, %11 : vector<2x4x1xf32>
    %54 = vector.broadcast %40 : f32 to vector<2x1x1xf32>
    %55 = arith.mulf %54, %23 : vector<2x1x1xf32>
    %56 = vector.broadcast %55 : vector<2x1x1xf32> to vector<2x4x1xf32>
    %57 = arith.addf %53, %56 : vector<2x4x1xf32>
    %58 = vector.broadcast %41 : f32 to vector<1x4x1xf32>
    %59 = arith.mulf %58, %33 : vector<1x4x1xf32>
    %60 = vector.broadcast %59 : vector<1x4x1xf32> to vector<2x4x1xf32>
    %61 = arith.addf %57, %60 : vector<2x4x1xf32>
    %cst_23 = arith.constant 9.99999974E-6 : f32
    %62 = vector.broadcast %cst_23 : f32 to vector<2x4x1xf32>
    %63 = arith.addf %61, %62 : vector<2x4x1xf32>
    %64 = math.rsqrt %63 : vector<2x4x1xf32>
    %c0_24 = arith.constant 0 : index
    %c0_25 = arith.constant 0 : index
    %c0_26 = arith.constant 0 : index
    %65 = vector.load %arg3[%c0_24, %c0_25, %c0_26] : memref<1x4x1xf32, #tpu.memory_space<vmem>>, vector<1x4x1xf32>
    %66 = vector.broadcast %65 : vector<1x4x1xf32> to vector<2x4x1xf32>
    %67 = arith.mulf %66, %64 : vector<2x4x1xf32>
    %c0_27 = arith.constant 0 : index
    %c0_28 = arith.constant 0 : index
    %c0_29 = arith.constant 0 : index
    %68 = vector.load %arg4[%c0_27, %c0_28, %c0_29] : memref<1x4x1xf32, #tpu.memory_space<vmem>>, vector<1x4x1xf32>
    %69 = arith.mulf %51, %67 : vector<2x4x1xf32>
    %70 = vector.broadcast %68 : vector<1x4x1xf32> to vector<2x4x1xf32>
    %71 = arith.subf %70, %69 : vector<2x4x1xf32>
    %72 = vector.broadcast %67 : vector<2x4x1xf32> to vector<2x4x256xf32>
    %73 = arith.mulf %0, %72 : vector<2x4x256xf32>
    %74 = vector.broadcast %71 : vector<2x4x1xf32> to vector<2x4x256xf32>
    %75 = arith.addf %73, %74 : vector<2x4x256xf32>
    %c0_30 = arith.constant 0 : index
    %c0_31 = arith.constant 0 : index
    %c0_32 = arith.constant 0 : index
    %76 = vector.load %arg7[%c0_30, %c0_31, %c0_32] : memref<2x4x256xf32, #tpu.memory_space<vmem>>, vector<2x4x256xf32>
    tpu.vector_store %arg7[%c0_30, %c0_31, %c0_32], %75 {strides = array<i32>} : memref<2x4x256xf32, #tpu.memory_space<vmem>>, vector<2x4x256xf32>,
    return
  }
}

</mosaic_0001>

<llo_original>
// kernel: tpu_custom_call.1
$region0: #{tpu_custom_call.1}
  #allocation0 [shape = 'u32[]', space=smem, size = 0x4, offset = 0x4, fixed_abs, tag = 'smem constant byte address 0x4 - core index']
  #allocation1 [shape = 'u32[144,128]{1,0:T(1,128)}', space=vmem, size = 0x12000, scoped, tag = 'internal scratch']
  %s0 = inlined_call_operand.vmem [shape: f32[2,4,256], index: 0, kind: input, shape index: {}]
  %s1 = inlined_call_operand.vmem [shape: f32[1,4,1], index: 1, kind: input, shape index: {}]
  %s2 = inlined_call_operand.vmem [shape: f32[1,4,1], index: 2, kind: input, shape index: {}]
  %s3 = inlined_call_operand.vmem [shape: f32[1,4,1], index: 3, kind: input, shape index: {}]
  %s4 = inlined_call_operand.vmem [shape: f32[1,4,1], index: 4, kind: input, shape index: {}]
  %s5 = inlined_call_operand.vmem [shape: f32[3], index: 5, kind: input, shape index: {}]
  %s6 = inlined_call_operand.vmem [shape: f32[3], index: 6, kind: input, shape index: {}]
  %s7 = inlined_call_operand.hbm [shape: f32[2,4,256], index: 7, kind: output, shape index: {0}]
  %s8 = inlined_call_operand.vmem [shape: f32[1,4,1], index: 8, kind: output, shape index: {1}]
  %s9 = inlined_call_operand.vmem [shape: f32[1,4,1], index: 9, kind: output, shape index: {2}]
  %10 = xla_tuple %s7, %s8, %s9
  %s11 = sld [smem:[#allocation0]]
  $region62: #{tpu_custom_call.1} parent=0
    _
  %s13 = ssub.s32 1, %s11
  %s14 = scalar_select 0, %s13, %s11
  $region1: #{tpu_custom_call.1} parent=0
    #allocation2 [shape = 'u8[512]{0}', space=smem, size = 0x200, scoped, tag = 'input window, operand 5, single buffered']
    #allocation3 [shape = 's32[1]{0}', space=sflag, size = 0x4, scoped, tag = 'scoped memory for tpu_custom_call.1']
    #allocation4 [shape = 's32[1]{0}', space=sflag, size = 0x4, scoped, tag = 'scoped memory for tpu_custom_call.1']
    #allocation5 [shape = 'u8[512]{0}', space=smem, size = 0x200, scoped, tag = 'input window, operand 6, single buffered']
    #allocation6 [shape = 's32[1]{0}', space=sflag, size = 0x4, scoped, tag = 'scoped memory for tpu_custom_call.1']
    #allocation7 [shape = 'u8[8192]{0}', space=vmem, size = 0x2000, scoped, tag = 'output window, operand 0, single buffered']
    %15 = vsyncpa [#allocation4], 0
    %16 = vsyncpa [#allocation6], 0
    %17 = vsyncpa [#allocation3], 0
    // Predicated region
    $region2: #{tpu_custom_call.1} parent=1 // pred_check
      _
    $region3: #{tpu_custom_call.1} parent=1 // pred_check_branch
      %19 = sbr.rel (0) target = $region5
    $region4: #{tpu_custom_call.1} parent=1 // pred_region
      _
    $region5: #{tpu_custom_call.1} parent=1 // pred_fallthru
      _
    // Predicated region
    $region6: #{tpu_custom_call.1} parent=1 // pred_check
      _
    $region7: #{tpu_custom_call.1} parent=1 // pred_check_branch
      %21 = sbr.rel (0) target = $region9
    $region8: #{tpu_custom_call.1} parent=1 // pred_region
      _
    $region9: #{tpu_custom_call.1} parent=1 // pred_fallthru
      _
    // Predicated region
    $region10: #{tpu_custom_call.1} parent=1 // pred_check
      _
    $region11: #{tpu_custom_call.1} parent=1 // pred_check_branch
      %23 = sbr.rel (0) target = $region13
    $region12: #{tpu_custom_call.1} parent=1 // pred_region
      _
    $region13: #{tpu_custom_call.1} parent=1 // pred_fallthru
      _
    // Predicated region
    $region14: #{tpu_custom_call.1} parent=1 // pred_check
      _
    $region15: #{tpu_custom_call.1} parent=1 // pred_check_branch
      %25 = sbr.rel (0) target = $region17
    $region16: #{tpu_custom_call.1} parent=1 // pred_region
      _
    $region17: #{tpu_custom_call.1} parent=1 // pred_fallthru
      _
    // Predicated region
    $region18: #{tpu_custom_call.1} parent=1 // pred_check
      _
    $region19: #{tpu_custom_call.1} parent=1 // pred_check_branch
      %27 = sbr.rel (0) target = $region21
    $region20: #{tpu_custom_call.1} parent=1 // pred_region
      _
    $region21: #{tpu_custom_call.1} parent=1 // pred_fallthru
      _
    // Predicated region
    $region22: #{tpu_custom_call.1} parent=1 // pred_check
      _
    $region23: #{tpu_custom_call.1} parent=1 // pred_check_branch
      %29 = sbr.rel (0) target = $region25
    $region24: #{tpu_custom_call.1} parent=1 // pred_region
      %s31 = ssub.s32 16, 16
      %32 = vsyncadd [#allocation4], %s31
      %s34 = sshll.u32 %s5, 4
      %s35 = int_to_ptr.vmem [resolvable:$true] %s34
      %37 = dma.vmem_to_smem %s35, 16, [#allocation2], [#allocation4]
    $region25: #{tpu_custom_call.1} parent=1 // pred_fallthru
      _
    // Predicated region
    $region26: #{tpu_custom_call.1} parent=1 // pred_check
      _
    $region27: #{tpu_custom_call.1} parent=1 // pred_check_branch
      %39 = sbr.rel (0) target = $region29
    $region28: #{tpu_custom_call.1} parent=1 // pred_region
      %s41 = ssub.s32 16, 16
      %42 = vsyncadd [#allocation6], %s41
      %s44 = sshll.u32 %s6, 4
      %s45 = int_to_ptr.vmem [resolvable:$true] %s44
      %47 = dma.vmem_to_smem %s45, 16, [#allocation5], [#allocation6]
    $region29: #{tpu_custom_call.1} parent=1 // pred_fallthru
      _
    // Predicated region
    $region30: #{tpu_custom_call.1} parent=1 // pred_check
      _
    $region31: #{tpu_custom_call.1} parent=1 // pred_check_branch
      %49 = sbr.rel (0) target = $region33
    $region32: #{tpu_custom_call.1} parent=1 // pred_region
      %50 = dma.done [#allocation4], 16
    $region33: #{tpu_custom_call.1} parent=1 // pred_fallthru
      _
    // Predicated region
    $region34: #{tpu_custom_call.1} parent=1 // pred_check
      _
    $region35: #{tpu_custom_call.1} parent=1 // pred_check_branch
      %52 = sbr.rel (0) target = $region37
    $region36: #{tpu_custom_call.1} parent=1 // pred_region
      %53 = dma.done [#allocation6], 16
    $region37: #{tpu_custom_call.1} parent=1 // pred_fallthru
      _
    %54 = sfence
    %v55 = vld [vmem:[%s0] sm:$0xff]
    %v56 = vld [vmem:[%s0 + $0x8] sm:$0xff]
    %v59 = vcombine.high %v55, %v55
    %v60 = vcombine.high %v56, %v56
    %vm63 = vcmask 1043456
    %v64 = vsel %vm63, %v55, 0.0
    %v65 = vsel %vm63, %v59, 0.0
    %v66 = vadd.f32 %v64, %v65
    %67 = vadd.xlane.f32.xlu0 %v66
    %v68 = vpop.xlane.xlu0 %67
    %v69 = vsel %vm63, %v56, 0.0
    %v70 = vsel %vm63, %v60, 0.0
    %v71 = vadd.f32 %v69, %v70
    %72 = vadd.xlane.f32.xlu0 %v71
    %v73 = vpop.xlane.xlu0 %72
    %v74 = vrcp.pop 256.0
    %v75 = vmul.f32 %v68, %v74
    %v76 = vmul.f32 %v73, %v74
    %v80 = vunpack.c.l.s4 839922192
    %v81 = vunpack.c.0.s8 %v80
    %v82 = vlaneseq
    %v83 = vshrl.u32 %v82, 7
    %v84 = vsub.s32 %v81, %v83
    %v85 = vrot.slane %v75, %v84
    %v87 = vunpack.c.l.s4 839922192
    %v88 = vunpack.c.0.s8 %v87
    %v89 = vlaneseq
    %v90 = vshrl.u32 %v89, 7
    %v91 = vsub.s32 %v88, %v90
    %v92 = vrot.slane %v76, %v91
    %v95 = vsub.f32 %v55, %v85
    %v96 = vsub.f32 %v56, %v92
    %v97 = vmul.f32 %v95, %v95
    %v98 = vmul.f32 %v96, %v96
    %v101 = vcombine.high %v97, %v97
    %v102 = vcombine.high %v98, %v98
    %v105 = vsel %vm63, %v97, 0.0
    %v106 = vsel %vm63, %v101, 0.0
    %v107 = vadd.f32 %v105, %v106
    %108 = vadd.xlane.f32.xlu0 %v107
    %v109 = vpop.xlane.xlu0 %108
    %v110 = vsel %vm63, %v98, 0.0
    %v111 = vsel %vm63, %v102, 0.0
    %v112 = vadd.f32 %v110, %v111
    %113 = vadd.xlane.f32.xlu0 %v112
    %v114 = vpop.xlane.xlu0 %113
    %v115 = vrcp.pop 255.0
    %v116 = vmul.f32 %v109, %v115
    %v117 = vmul.f32 %v114, %v115
    %v118 = vmul.f32 %v75, %v75
    %v119 = vmul.f32 %v76, %v76
    %v120 = vadd.f32 %v116, %v118
    %v121 = vadd.f32 %v117, %v119
    %v122 = vsel %vm63, %v75, 0.0
    %v123 = vrot.slane %v122, 4
    %v124 = vadd.f32 %v122, %v123
    %v125 = vrot.slane %v124, 2
    %v126 = vadd.f32 %v124, %v125
    %v127 = vrot.slane %v126, 1
    %v128 = vadd.f32 %v126, %v127
    %v129 = vsel %vm63, %v76, 0.0
    %v130 = vrot.slane %v129, 4
    %v131 = vadd.f32 %v129, %v130
    %v132 = vrot.slane %v131, 2
    %v133 = vadd.f32 %v131, %v132
    %v134 = vrot.slane %v133, 1
    %v135 = vadd.f32 %v133, %v134
    %v136 = vrcp.pop 4.0
    %v137 = vmul.f32 %v128, %v136
    %v138 = vmul.f32 %v135, %v136
    %v139 = vsel %vm63, %v120, 0.0
    %v140 = vrot.slane %v139, 4
    %v141 = vadd.f32 %v139, %v140
    %v142 = vrot.slane %v141, 2
    %v143 = vadd.f32 %v141, %v142
    %v144 = vrot.slane %v143, 1
    %v145 = vadd.f32 %v143, %v144
    %v146 = vsel %vm63, %v121, 0.0
    %v147 = vrot.slane %v146, 4
    %v148 = vadd.f32 %v146, %v147
    %v149 = vrot.slane %v148, 2
    %v150 = vadd.f32 %v148, %v149
    %v151 = vrot.slane %v150, 1
    %v152 = vadd.f32 %v150, %v151
    %v153 = vmul.f32 %v145, %v136
    %v154 = vmul.f32 %v152, %v136
    %v155 = vmul.f32 %v137, %v137
    %v156 = vmul.f32 %v138, %v138
    %v157 = vsub.f32 %v153, %v155
    %v158 = vsub.f32 %v154, %v156
    %v159 = vadd.f32 %v122, %v129
    %v160 = vrcp.pop 2.0
    %v161 = vmul.f32 %v159, %v160
    %v162 = vadd.f32 %v139, %v146
    %v163 = vmul.f32 %v162, %v160
    %v164 = vmul.f32 %v161, %v161
    %v165 = vsub.f32 %v163, %v164
    %vm166 = vcmask 3072
    %167 = vst.msk [vmem:[%s8] sm:$0xf] %vm166, %v161
    %168 = vst.msk [vmem:[%s9] sm:$0xf] %vm166, %v165
    %s169 = sld [smem:[#allocation2]]
    %s170 = sld [smem:[#allocation2 + $0x1]]
    %s171 = sld [smem:[#allocation2 + $0x2]]
    %s172 = sld [smem:[#allocation5]]
    %s173 = sld [smem:[#allocation5 + $0x1]]
    %s174 = sld [smem:[#allocation5 + $0x2]]
    %v175 = vstv %s169
    %v176 = vmul.f32 %v175, %v75
    %v177 = vmul.f32 %v175, %v76
    %v178 = vstv %s170
    %v179 = vmul.f32 %v178, %v137
    %v180 = vmul.f32 %v178, %v138
    %v181 = vadd.f32 %v176, %v179
    %v182 = vadd.f32 %v177, %v180
    %v183 = vstv %s171
    %v184 = vmul.f32 %v183, %v161
    %v185 = vadd.f32 %v181, %v184
    %v186 = vadd.f32 %v182, %v184
    %v187 = vstv %s172
    %v188 = vmul.f32 %v187, %v116
    %v189 = vmul.f32 %v187, %v117
    %v190 = vstv %s173
    %v191 = vmul.f32 %v190, %v157
    %v192 = vmul.f32 %v190, %v158
    %v193 = vadd.f32 %v188, %v191
    %v194 = vadd.f32 %v189, %v192
    %v195 = vstv %s174
    %v196 = vmul.f32 %v195, %v165
    %v197 = vadd.f32 %v193, %v196
    %v198 = vadd.f32 %v194, %v196
    %v199 = vadd.f32 %v197, 1e-05
    %v200 = vadd.f32 %v198, 1e-05
    %v201 = vrsqrt.pop %v199
    %v202 = vrsqrt.pop %v200
    %v203 = vld [vmem:[%s3] sm:$0xf]
    %v204 = vmul.f32 %v203, %v201
    %v205 = vmul.f32 %v203, %v202
    %v206 = vld [vmem:[%s4] sm:$0xf]
    %v207 = vmul.f32 %v185, %v204
    %v208 = vmul.f32 %v186, %v205
    %v209 = vsub.f32 %v206, %v207
    %v210 = vsub.f32 %v206, %v208
    %212 = vset.pattern.permute.xlu0 0
    %213 = vperm.xlu0 %212, %v204
    %v214 = vpop.permute.xlu0 %213
    %216 = vset.pattern.permute.xlu0 0
    %217 = vperm.xlu0 %216, %v205
    %v218 = vpop.permute.xlu0 %217
    %v220 = vunpack.c.l.s4 839922192
    %v221 = vunpack.c.0.s8 %v220
    %v222 = vlaneseq
    %v223 = vshrl.u32 %v222, 7
    %v224 = vsub.s32 %v221, %v223
    %v225 = vrot.slane %v214, %v224
    %v227 = vunpack.c.l.s4 839922192
    %v228 = vunpack.c.0.s8 %v227
    %v229 = vlaneseq
    %v230 = vshrl.u32 %v229, 7
    %v231 = vsub.s32 %v228, %v230
    %v232 = vrot.slane %v218, %v231
    %v235 = vmul.f32 %v55, %v225
    %v236 = vmul.f32 %v56, %v232
    %238 = vset.pattern.permute.xlu0 0
    %239 = vperm.xlu0 %238, %v209
    %v240 = vpop.permute.xlu0 %239
    %242 = vset.pattern.permute.xlu0 0
    %243 = vperm.xlu0 %242, %v210
    %v244 = vpop.permute.xlu0 %243
    %v246 = vunpack.c.l.s4 839922192
    %v247 = vunpack.c.0.s8 %v246
    %v248 = vlaneseq
    %v249 = vshrl.u32 %v248, 7
    %v250 = vsub.s32 %v247, %v249
    %v251 = vrot.slane %v240, %v250
    %v253 = vunpack.c.l.s4 839922192
    %v254 = vunpack.c.0.s8 %v253
    %v255 = vlaneseq
    %v256 = vshrl.u32 %v255, 7
    %v257 = vsub.s32 %v254, %v256
    %v258 = vrot.slane %v244, %v257
    %v261 = vadd.f32 %v235, %v251
    %v262 = vadd.f32 %v236, %v258
    %263 = vst [vmem:[#allocation7] sm:$0xff] %v261
    %264 = vst [vmem:[#allocation7 + $0x8] sm:$0xff] %v262
    // Predicated region
    $region38: #{tpu_custom_call.1} parent=1 // pred_check
      _
    $region39: #{tpu_custom_call.1} parent=1 // pred_check_branch
      %266 = sbr.rel (0) target = $region41
    $region40: #{tpu_custom_call.1} parent=1 // pred_region
      %s268 = ssub.s32 256, 256
      %269 = vsyncadd [#allocation3], %s268
      %s270 = sshll.u32 [#allocation7], 4
      %s271 = int_to_ptr.vmem [resolvable:$true] %s270
      %276 = dma.vmem_to_hbm [thread:$0]  %s271, 256, %s7, [#allocation3], 128, 128, 8
    $region41: #{tpu_custom_call.1} parent=1 // pred_fallthru
      _
    // Predicated region
    $region42: #{tpu_custom_call.1} parent=1 // pred_check
      _
    $region43: #{tpu_custom_call.1} parent=1 // pred_check_branch
      %278 = sbr.rel (0) target = $region45
    $region44: #{tpu_custom_call.1} parent=1 // pred_region
      _
    $region45: #{tpu_custom_call.1} parent=1 // pred_fallthru
      _
    // Predicated region
    $region46: #{tpu_custom_call.1} parent=1 // pred_check
      _
    $region47: #{tpu_custom_call.1} parent=1 // pred_check_branch
      %280 = sbr.rel (0) target = $region49
    $region48: #{tpu_custom_call.1} parent=1 // pred_region
      _
    $region49: #{tpu_custom_call.1} parent=1 // pred_fallthru
      _
    // Predicated region
    $region50: #{tpu_custom_call.1} parent=1 // pred_check
      _
    $region51: #{tpu_custom_call.1} parent=1 // pred_check_branch
      %282 = sbr.rel (0) target = $region53
    $region52: #{tpu_custom_call.1} parent=1 // pred_region
      %283 = dma.done [#allocation3], 256
    $region53: #{tpu_custom_call.1} parent=1 // pred_fallthru
      _
    // Predicated region
    $region54: #{tpu_custom_call.1} parent=1 // pred_check
      _
    $region55: #{tpu_custom_call.1} parent=1 // pred_check_branch
      %285 = sbr.rel (0) target = $region57
    $region56: #{tpu_custom_call.1} parent=1 // pred_region
      _
    $region57: #{tpu_custom_call.1} parent=1 // pred_fallthru
      _
    // Predicated region
    $region58: #{tpu_custom_call.1} parent=1 // pred_check
      _
    $region59: #{tpu_custom_call.1} parent=1 // pred_check_branch
      %287 = sbr.rel (0) target = $region61
    $region60: #{tpu_custom_call.1} parent=1 // pred_region
      _
    $region61: #{tpu_custom_call.1} parent=1 // pred_fallthru
      _
    %288 = vsyncpa [#allocation3], 1
    %289 = vsyncpa [#allocation4], 1
    %290 = vsyncpa [#allocation6], 1

</llo_original>
